<compile_context>
chip_gen: v6e
topology: v6e:2x2x1
jax: 0.10.0
libtpu: 0.0.40
codegen_flags: <defaults>
</compile_context>

<pallas_src>
import functools

import jax
import jax.numpy as jnp
from jax.experimental import pallas as pl
from jax.experimental.pallas import tpu as pltpu


def _gradnorm_kernel(n: int, l_ref, w_ref, out_ref):
    # l_ref, w_ref: (n,) f32 refs in SMEM (unpadded).
    # out_ref:      (1,) f32 ref in SMEM (scalar result).
    # Fully unrolled scalar MAC chain on the scalar ALUs — no vector units used.
    acc = l_ref[0] * w_ref[0]
    for i in range(1, n):
        acc = acc + l_ref[i] * w_ref[i]
    out_ref[0] = acc


def _gradnorm_pallas(L_t: jax.Array, w: jax.Array) -> jax.Array:
    n = L_t.shape[0]
    # SMEM wants 32-bit words; spec dtype is f32 so these casts are no-ops on
    # the normal path and only fire for (e.g.) bf16 inputs.
    if L_t.dtype != jnp.float32:
        L_t = L_t.astype(jnp.float32)
    if w.dtype != jnp.float32:
        w = w.astype(jnp.float32)

    out = pl.pallas_call(
        functools.partial(_gradnorm_kernel, n),
        out_shape=jax.ShapeDtypeStruct((1,), jnp.float32),
        in_specs=[
            pl.BlockSpec(memory_space=pltpu.MemorySpace.SMEM),
            pl.BlockSpec(memory_space=pltpu.MemorySpace.SMEM),
        ],
        out_specs=pl.BlockSpec(memory_space=pltpu.MemorySpace.SMEM),
    )(L_t, w)
    return out[0]


# --- custom VJP: pallas_call has no automatic VJP, but GradNorm training needs
#     d(total)/dw = L_t and grads flowing through L_t into the shared trunk. ---
@jax.custom_vjp
def _gradnorm_total_loss(L_t: jax.Array, w: jax.Array) -> jax.Array:
    return _gradnorm_pallas(L_t, w)


def _gradnorm_fwd(L_t, w):
    return _gradnorm_pallas(L_t, w), (L_t, w)


def _gradnorm_bwd(res, g):
    L_t, w = res
    return (g * w, g * L_t)


_gradnorm_total_loss.defvjp(_gradnorm_fwd, _gradnorm_bwd)

# Public entry point (jit keeps the tiny dtype-guard plumbing fused with the call).
gradnorm_total_loss = jax.jit(_gradnorm_total_loss)


class GradNormLossJax:
    """JAX mirror of the PyTorch GradNormLoss module's forward pass."""

    def __init__(self, num_of_task: int, alpha: float = 1.5):
        self.num_of_task = num_of_task
        self.alpha = alpha
        # nn.Parameter(torch.ones(num_of_task)) — deterministic init
        self.w = jnp.ones((num_of_task,), dtype=jnp.float32)
        self.L_0 = None

    def forward(self, L_t: jax.Array) -> jax.Array:
        if self.L_0 is None:
            self.L_0 = jax.lax.stop_gradient(L_t)
        self.L_t = L_t
        # wL_t is not materialized separately; it is folded into the kernel.
        total_loss = gradnorm_total_loss(L_t, self.w)
        self.total_loss = total_loss
        return total_loss


if __name__ == "__main__":
    num_of_task = 8  # small shape consistent with the module

    key = jax.random.PRNGKey(0)
    # Synthetic per-task losses (positive, like real losses)
    L_t = jnp.abs(jax.random.normal(key, (num_of_task,), dtype=jnp.float32)) + 0.1

    module = GradNormLossJax(num_of_task=num_of_task, alpha=1.5)
    total = jax.block_until_ready(module.forward(L_t))

    # Reference check in plain JAX
    ref = jnp.sum(L_t * module.w)
    assert jnp.allclose(total, ref, rtol=1e-6, atol=1e-6), (total, ref)

    # Second call exercises the cached jit/kernel path and the L_0 cache branch.
    total2 = jax.block_until_ready(module.forward(L_t * 2.0))
    ref2 = jnp.sum((L_t * 2.0) * module.w)
    assert jnp.allclose(total2, ref2, rtol=1e-6, atol=1e-6), (total2, ref2)

    # Gradient check through the custom VJP (backward is pure JAX, no 2nd kernel).
    gL, gw = jax.grad(gradnorm_total_loss, argnums=(0, 1))(L_t, module.w)
    gL, gw = jax.block_until_ready((gL, gw))
    assert jnp.allclose(gL, module.w, rtol=1e-6, atol=1e-6)
    assert jnp.allclose(gw, L_t, rtol=1e-6, atol=1e-6)

    print("KERNEL_OK")
</pallas_src>

<mosaic_0001>
module attributes {stable_mosaic.version = 11 : i64} {
  func.func @_gradnorm_kernel(%arg0: memref<8xf32, #tpu.memory_space<smem>>, %arg1: memref<8xf32, #tpu.memory_space<smem>>, %arg2: memref<1xf32, #tpu.memory_space<smem>>) attributes {dimension_semantics = [], scalar_prefetch = 0 : i64, scratch_operands = 0 : i64, tpu.core_type = #tpu.core_type<tc>} {
    %c0 = arith.constant 0 : index
    %0 = memref.load %arg0[%c0] : memref<8xf32, #tpu.memory_space<smem>>
    %c0_0 = arith.constant 0 : index
    %1 = memref.load %arg1[%c0_0] : memref<8xf32, #tpu.memory_space<smem>>
    %2 = arith.mulf %0, %1 : f32
    %c1 = arith.constant 1 : index
    %3 = memref.load %arg0[%c1] : memref<8xf32, #tpu.memory_space<smem>>
    %c1_1 = arith.constant 1 : index
    %4 = memref.load %arg1[%c1_1] : memref<8xf32, #tpu.memory_space<smem>>
    %5 = arith.mulf %3, %4 : f32
    %6 = arith.addf %2, %5 : f32
    %c2 = arith.constant 2 : index
    %7 = memref.load %arg0[%c2] : memref<8xf32, #tpu.memory_space<smem>>
    %c2_2 = arith.constant 2 : index
    %8 = memref.load %arg1[%c2_2] : memref<8xf32, #tpu.memory_space<smem>>
    %9 = arith.mulf %7, %8 : f32
    %10 = arith.addf %6, %9 : f32
    %c3 = arith.constant 3 : index
    %11 = memref.load %arg0[%c3] : memref<8xf32, #tpu.memory_space<smem>>
    %c3_3 = arith.constant 3 : index
    %12 = memref.load %arg1[%c3_3] : memref<8xf32, #tpu.memory_space<smem>>
    %13 = arith.mulf %11, %12 : f32
    %14 = arith.addf %10, %13 : f32
    %c4 = arith.constant 4 : index
    %15 = memref.load %arg0[%c4] : memref<8xf32, #tpu.memory_space<smem>>
    %c4_4 = arith.constant 4 : index
    %16 = memref.load %arg1[%c4_4] : memref<8xf32, #tpu.memory_space<smem>>
    %17 = arith.mulf %15, %16 : f32
    %18 = arith.addf %14, %17 : f32
    %c5 = arith.constant 5 : index
    %19 = memref.load %arg0[%c5] : memref<8xf32, #tpu.memory_space<smem>>
    %c5_5 = arith.constant 5 : index
    %20 = memref.load %arg1[%c5_5] : memref<8xf32, #tpu.memory_space<smem>>
    %21 = arith.mulf %19, %20 : f32
    %22 = arith.addf %18, %21 : f32
    %c6 = arith.constant 6 : index
    %23 = memref.load %arg0[%c6] : memref<8xf32, #tpu.memory_space<smem>>
    %c6_6 = arith.constant 6 : index
    %24 = memref.load %arg1[%c6_6] : memref<8xf32, #tpu.memory_space<smem>>
    %25 = arith.mulf %23, %24 : f32
    %26 = arith.addf %22, %25 : f32
    %c7 = arith.constant 7 : index
    %27 = memref.load %arg0[%c7] : memref<8xf32, #tpu.memory_space<smem>>
    %c7_7 = arith.constant 7 : index
    %28 = memref.load %arg1[%c7_7] : memref<8xf32, #tpu.memory_space<smem>>
    %29 = arith.mulf %27, %28 : f32
    %30 = arith.addf %26, %29 : f32
    %c0_8 = arith.constant 0 : index
    %31 = memref.load %arg2[%c0_8] : memref<1xf32, #tpu.memory_space<smem>>
    memref.store %30, %arg2[%c0_8] : memref<1xf32, #tpu.memory_space<smem>>
    return
  }
}

</mosaic_0001>

<llo_original>
// kernel: _gradnorm_total_loss.1
$region0: #{_gradnorm_total_loss.1}
  #allocation0 [shape = 'u32[]', space=smem, size = 0x4, offset = 0x4, fixed_abs, tag = 'smem constant byte address 0x4 - core index']
  #allocation1 [shape = 'u32[144,128]{1,0:T(1,128)}', space=vmem, size = 0x12000, scoped, tag = 'internal scratch']
  %s0 = inlined_call_operand.hbm [shape: f32[8], index: 0, kind: input, shape index: {}]
  %s1 = inlined_call_operand.vmem [shape: f32[8], index: 1, kind: input, shape index: {}]
  %s2 = inlined_call_operand.hbm [shape: f32[1], index: 2, kind: output, shape index: {}]
  %s3 = sld [smem:[#allocation0]]
  $region26: #{_gradnorm_total_loss.1} parent=0
    _
  %s5 = ssub.s32 1, %s3
  %s6 = scalar_select 0, %s5, %s3
  $region1: #{_gradnorm_total_loss.1} parent=0
    #allocation2 [shape = 'u8[512]{0}', space=smem, size = 0x200, scoped, tag = 'input window, operand 0, single buffered']
    #allocation3 [shape = 's32[1]{0}', space=sflag, size = 0x4, scoped, tag = 'scoped memory for _gradnorm_total_loss.1']
    #allocation4 [shape = 's32[1]{0}', space=sflag, size = 0x4, scoped, tag = 'scoped memory for _gradnorm_total_loss.1']
    #allocation5 [shape = 's32[1]{0}', space=sflag, size = 0x4, scoped, tag = 'scoped memory for _gradnorm_total_loss.1']
    #allocation6 [shape = 'u8[512]{0}', space=smem, size = 0x200, scoped, tag = 'input window, operand 1, single buffered']
    #allocation7 [shape = 'u8[512]{0}', space=smem, size = 0x200, scoped, tag = 'output window, operand 0, single buffered']
    %7 = vsyncpa [#allocation3], 0
    %8 = vsyncpa [#allocation5], 0
    %9 = vsyncpa [#allocation4], 0
    // Predicated region
    $region2: #{_gradnorm_total_loss.1} parent=1 // pred_check
      _
    $region3: #{_gradnorm_total_loss.1} parent=1 // pred_check_branch
      %11 = sbr.rel (0) target = $region5
    $region4: #{_gradnorm_total_loss.1} parent=1 // pred_region
      %s13 = ssub.s32 16, 16
      %14 = vsyncadd [#allocation3], %s13
      %17 = dma.hbm_to_smem %s0, 16, [#allocation2], [#allocation3]
    $region5: #{_gradnorm_total_loss.1} parent=1 // pred_fallthru
      _
    // Predicated region
    $region6: #{_gradnorm_total_loss.1} parent=1 // pred_check
      _
    $region7: #{_gradnorm_total_loss.1} parent=1 // pred_check_branch
      %19 = sbr.rel (0) target = $region9
    $region8: #{_gradnorm_total_loss.1} parent=1 // pred_region
      %s21 = ssub.s32 16, 16
      %22 = vsyncadd [#allocation5], %s21
      %s24 = sshll.u32 %s1, 4
      %s25 = int_to_ptr.vmem [resolvable:$true] %s24
      %27 = dma.vmem_to_smem %s25, 16, [#allocation6], [#allocation5]
    $region9: #{_gradnorm_total_loss.1} parent=1 // pred_fallthru
      _
    // Predicated region
    $region10: #{_gradnorm_total_loss.1} parent=1 // pred_check
      _
    $region11: #{_gradnorm_total_loss.1} parent=1 // pred_check_branch
      %29 = sbr.rel (0) target = $region13
    $region12: #{_gradnorm_total_loss.1} parent=1 // pred_region
      %30 = dma.done [#allocation3], 16
    $region13: #{_gradnorm_total_loss.1} parent=1 // pred_fallthru
      _
    // Predicated region
    $region14: #{_gradnorm_total_loss.1} parent=1 // pred_check
      _
    $region15: #{_gradnorm_total_loss.1} parent=1 // pred_check_branch
      %32 = sbr.rel (0) target = $region17
    $region16: #{_gradnorm_total_loss.1} parent=1 // pred_region
      %33 = dma.done [#allocation5], 16
    $region17: #{_gradnorm_total_loss.1} parent=1 // pred_fallthru
      _
    %34 = sfence
    %s35 = sld [smem:[#allocation2]]
    %s36 = sld [smem:[#allocation6]]
    %s37 = smul.f32 %s35, %s36
    %s38 = sld [smem:[#allocation2 + $0x1]]
    %s39 = sld [smem:[#allocation6 + $0x1]]
    %s40 = smul.f32 %s38, %s39
    %s41 = sadd.f32 %s37, %s40
    %s42 = sld [smem:[#allocation2 + $0x2]]
    %s43 = sld [smem:[#allocation6 + $0x2]]
    %s44 = smul.f32 %s42, %s43
    %s45 = sadd.f32 %s41, %s44
    %s46 = sld [smem:[#allocation2 + $0x3]]
    %s47 = sld [smem:[#allocation6 + $0x3]]
    %s48 = smul.f32 %s46, %s47
    %s49 = sadd.f32 %s45, %s48
    %s50 = sld [smem:[#allocation2 + $0x4]]
    %s51 = sld [smem:[#allocation6 + $0x4]]
    %s52 = smul.f32 %s50, %s51
    %s53 = sadd.f32 %s49, %s52
    %s54 = sld [smem:[#allocation2 + $0x5]]
    %s55 = sld [smem:[#allocation6 + $0x5]]
    %s56 = smul.f32 %s54, %s55
    %s57 = sadd.f32 %s53, %s56
    %s58 = sld [smem:[#allocation2 + $0x6]]
    %s59 = sld [smem:[#allocation6 + $0x6]]
    %s60 = smul.f32 %s58, %s59
    %s61 = sadd.f32 %s57, %s60
    %s62 = sld [smem:[#allocation2 + $0x7]]
    %s63 = sld [smem:[#allocation6 + $0x7]]
    %s64 = smul.f32 %s62, %s63
    %s65 = sadd.f32 %s61, %s64
    %s66 = scalar_lea.smem [#allocation7], 0
    %67 = sst [smem:[%s66]] %s65
    // Predicated region
    $region18: #{_gradnorm_total_loss.1} parent=1 // pred_check
      _
    $region19: #{_gradnorm_total_loss.1} parent=1 // pred_check_branch
      %69 = sbr.rel (0) target = $region21
    $region20: #{_gradnorm_total_loss.1} parent=1 // pred_region
      %s71 = ssub.s32 16, 16
      %72 = vsyncadd [#allocation4], %s71
      %75 = dma.smem_to_hbm [#allocation7], 16, %s2, [#allocation4]
    $region21: #{_gradnorm_total_loss.1} parent=1 // pred_fallthru
      _
    // Predicated region
    $region22: #{_gradnorm_total_loss.1} parent=1 // pred_check
      _
    $region23: #{_gradnorm_total_loss.1} parent=1 // pred_check_branch
      %77 = sbr.rel (0) target = $region25
    $region24: #{_gradnorm_total_loss.1} parent=1 // pred_region
      %78 = dma.done [#allocation4], 16
    $region25: #{_gradnorm_total_loss.1} parent=1 // pred_fallthru
      _
    %79 = sfence
    %80 = vsyncpa [#allocation3], 1
    %81 = vsyncpa [#allocation4], 1
    %82 = vsyncpa [#allocation5], 1

</llo_original>
